<compile_context>
chip_gen: v6e
topology: v6e:2x2x1
jax: 0.10.0
libtpu: 0.0.40
codegen_flags: <defaults>
</compile_context>

<pallas_src>
import jax
import jax.numpy as jnp
from jax import lax
from jax.experimental import pallas as pl
from jax.experimental.pallas import tpu as pltpu


def _mlp_kernel(x_ref, w1_ref, b1_ref, w2_ref, b2_ref, w3_ref, b3_ref, o_ref):
    # x tile (tb, d) f32 -> bf16 for the MXU; all accumulation in f32.
    x = x_ref[...].astype(jnp.bfloat16)

    # Layer 1: Linear + ReLU   (dropout = identity in eval mode)
    h1 = jnp.dot(x, w1_ref[...], preferred_element_type=jnp.float32)
    h1 = jnp.maximum(h1 + b1_ref[...], 0.0)

    # Layer 2: Linear + ReLU   (dropout = identity in eval mode)
    h2 = jnp.dot(h1.astype(jnp.bfloat16), w2_ref[...],
                 preferred_element_type=jnp.float32)
    h2 = jnp.maximum(h2 + b2_ref[...], 0.0)

    # Output layer with batch packed along lanes:
    #   (1, H2p) . (tb, H2p)^T  ->  (1, tb)   (lane-dense store, 4 B/row of HBM)
    out = lax.dot_general(
        w3_ref[...], h2.astype(jnp.bfloat16),
        dimension_numbers=(((1,), (1,)), ((), ())),
        preferred_element_type=jnp.float32)
    o_ref[...] = (out + b3_ref[...]).astype(o_ref.dtype)


def _round_up(n, m):
    return ((n + m - 1) // m) * m


def ann_forward(x, params, *, batch_tile=2048):
    """Fused forward pass of the 3-layer MLP as a single Pallas kernel.

    x: (batch, input_dim) float32
    params: dict with w1 (D,H1), b1 (1,H1), w2 (H1,H2), b2 (1,H2),
            w3 (H2,1), b3 (1,1)   (logical, unpadded, float32)
    returns: (batch, 1) float32 logits
    """
    w1, b1 = params["w1"], params["b1"]
    w2, b2 = params["w2"], params["b2"]
    w3, b3 = params["w3"], params["b3"]

    batch, d = x.shape
    h1 = w1.shape[1]
    h2 = w2.shape[1]

    # Only hidden dims of the (tiny, loaded-once) weights get padded to lanes.
    h1_p = _round_up(h1, 128)
    h2_p = _round_up(h2, 128)

    # Batch tile: multiple of 8 sublanes; large default amortizes per-step
    # overhead; capped so the grid has >= 2 steps whenever batch allows it
    # (v7x megacore sharding of the "parallel" axis).
    tb = _round_up(max(8, min(batch_tile, _round_up(batch, 8))), 8)
    num_tiles = pl.cdiv(batch, tb)
    if num_tiles < 2 and batch >= 16:
        tb = _round_up(pl.cdiv(batch, 2), 8)
        num_tiles = pl.cdiv(batch, tb)

    bf16, f32 = jnp.bfloat16, jnp.float32
    # Exact zero padding: padded hidden units have weight=0, bias=0 -> ReLU(0)=0.
    w1p = jnp.zeros((d, h1_p), bf16).at[:, :h1].set(w1.astype(bf16))
    b1p = jnp.zeros((1, h1_p), f32).at[:, :h1].set(b1)
    w2p = jnp.zeros((h1_p, h2_p), bf16).at[:h1, :h2].set(w2.astype(bf16))
    b2p = jnp.zeros((1, h2_p), f32).at[:, :h2].set(b2)
    w3p = jnp.zeros((1, h2_p), bf16).at[:, :h2].set(w3.astype(bf16).T)
    b3p = b3.astype(f32).reshape(1, 1)

    grid = (num_tiles,)

    # Cost estimate from the real (unpadded) streams: this kernel is HBM-bound.
    flops = 2 * batch * (d * h1 + h1 * h2 + h2 * 1)
    bytes_accessed = (
        batch * d * 4                                   # x stream (f32, unpadded)
        + w1p.size * 2 + w2p.size * 2 + w3p.size * 2    # bf16 weights (once)
        + b1p.size * 4 + b2p.size * 4 + b3p.size * 4    # f32 biases (once)
        + num_tiles * tb * 4                            # lane-packed logits
    )

    out = pl.pallas_call(
        _mlp_kernel,
        out_shape=jax.ShapeDtypeStruct((num_tiles, 1, tb), jnp.float32),
        grid=grid,
        in_specs=[
            # Streamed, unpadded batch tile (ragged last tile handled by Pallas).
            pl.BlockSpec((tb, d), lambda i: (i, 0)),
            # Weights / biases: constant index_map -> VMEM-resident across steps.
            pl.BlockSpec((d, h1_p), lambda i: (0, 0)),
            pl.BlockSpec((1, h1_p), lambda i: (0, 0)),
            pl.BlockSpec((h1_p, h2_p), lambda i: (0, 0)),
            pl.BlockSpec((1, h2_p), lambda i: (0, 0)),
            pl.BlockSpec((1, h2_p), lambda i: (0, 0)),
            pl.BlockSpec((1, 1), lambda i: (0, 0)),
        ],
        # Lane-dense logits: one (1, tb) row per grid step.
        out_specs=pl.BlockSpec((None, 1, tb), lambda i: (i, 0, 0)),
        compiler_params=pltpu.CompilerParams(
            dimension_semantics=("parallel",),   # v7x: shard batch over 2 TCs
        ),
        cost_estimate=pl.CostEstimate(
            flops=flops, bytes_accessed=bytes_accessed, transcendentals=0),
    )(x, w1p, b1p, w2p, b2p, w3p, b3p)

    # Rows >= batch in the last tile are garbage; slice them off.
    return out.reshape(-1)[:batch].reshape(batch, 1)


def init_params(key, input_dim, hidden_dim1, hidden_dim2):
    """Deterministic init mimicking nn.Linear default (U[-1/sqrt(fan_in), ...])."""
    ks = jax.random.split(key, 6)

    def lin(kw, kb, fan_in, fan_out):
        bound = 1.0 / jnp.sqrt(float(fan_in))
        w = jax.random.uniform(kw, (fan_in, fan_out), jnp.float32, -bound, bound)
        b = jax.random.uniform(kb, (1, fan_out), jnp.float32, -bound, bound)
        return w, b

    w1, b1 = lin(ks[0], ks[1], input_dim, hidden_dim1)
    w2, b2 = lin(ks[2], ks[3], hidden_dim1, hidden_dim2)
    w3, b3 = lin(ks[4], ks[5], hidden_dim2, 1)
    return {"w1": w1, "b1": b1, "w2": w2, "b2": b2, "w3": w3, "b3": b3}


def _reference(x, params):
    # Eval-mode reference in plain JAX (dropout = identity).
    h1 = jnp.maximum(x @ params["w1"] + params["b1"], 0.0)
    h2 = jnp.maximum(h1 @ params["w2"] + params["b2"], 0.0)
    return h2 @ params["w3"] + params["b3"]


if __name__ == "__main__":
    key = jax.random.PRNGKey(0)
    k_params, k_x1, k_x2 = jax.random.split(key, 3)

    input_dim, hidden1, hidden2 = 16, 32, 32
    params = init_params(k_params, input_dim, hidden1, hidden2)

    # Case 1: small batch, single grid step.
    x1 = jax.random.normal(k_x1, (8, input_dim), jnp.float32)
    out1 = jax.block_until_ready(ann_forward(x1, params))
    ref1 = _reference(x1, params)
    assert out1.shape == (8, 1)
    assert jnp.allclose(out1, ref1, atol=2e-2, rtol=2e-2), (out1, ref1)

    # Case 2: multi-step grid with a ragged last tile (exercises the cdiv grid,
    # the lane-packed output reshape, and the >=2-step megacore path).
    x2 = jax.random.normal(k_x2, (40, input_dim), jnp.float32)
    out2 = jax.block_until_ready(ann_forward(x2, params, batch_tile=16))
    ref2 = _reference(x2, params)
    assert out2.shape == (40, 1)
    assert jnp.allclose(out2, ref2, atol=2e-2, rtol=2e-2), (out2, ref2)

    print("KERNEL_OK")
</pallas_src>

<mosaic_0001>
module attributes {stable_mosaic.version = 11 : i64} {
  func.func @_mlp_kernel(%arg0: i32, %arg1: memref<8x16xf32, #tpu.memory_space<vmem>>, %arg2: memref<16x128xbf16, #tpu.memory_space<vmem>>, %arg3: memref<1x128xf32, #tpu.memory_space<vmem>>, %arg4: memref<128x128xbf16, #tpu.memory_space<vmem>>, %arg5: memref<1x128xf32, #tpu.memory_space<vmem>>, %arg6: memref<1x128xbf16, #tpu.memory_space<vmem>>, %arg7: memref<1x1xf32, #tpu.memory_space<vmem>>, %arg8: memref<1x1x8xf32, #tpu.memory_space<vmem>>) attributes {dimension_semantics = [#tpu.dimension_semantics<parallel>], iteration_bounds = array<i64: 1>, scalar_prefetch = 0 : i64, scratch_operands = 0 : i64, tpu.core_type = #tpu.core_type<tc>, window_params = [{transform_indices = @transform_0, window_bounds = array<i64: 8, 16>}, {pipeline_mode = #tpu.pipeline_mode<synchronous>, transform_indices = @transform_1, window_bounds = array<i64: 16, 128>}, {pipeline_mode = #tpu.pipeline_mode<synchronous>, transform_indices = @transform_2, window_bounds = array<i64: 1, 128>}, {pipeline_mode = #tpu.pipeline_mode<synchronous>, transform_indices = @transform_3, window_bounds = array<i64: 128, 128>}, {pipeline_mode = #tpu.pipeline_mode<synchronous>, transform_indices = @transform_4, window_bounds = array<i64: 1, 128>}, {pipeline_mode = #tpu.pipeline_mode<synchronous>, transform_indices = @transform_5, window_bounds = array<i64: 1, 128>}, {pipeline_mode = #tpu.pipeline_mode<synchronous>, transform_indices = @transform_6, window_bounds = array<i64: 1, 1>}, {transform_indices = @transform_7, window_bounds = array<i64: 1, 1, 8>}]} {
    %c0 = arith.constant 0 : index
    %c0_0 = arith.constant 0 : index
    %0 = vector.load %arg1[%c0, %c0_0] : memref<8x16xf32, #tpu.memory_space<vmem>>, vector<8x16xf32>
    %1 = arith.truncf %0 : vector<8x16xf32> to vector<8x16xbf16>
    %c0_1 = arith.constant 0 : index
    %c0_2 = arith.constant 0 : index
    %2 = vector.load %arg2[%c0_1, %c0_2] : memref<16x128xbf16, #tpu.memory_space<vmem>>, vector<16x128xbf16>
    %cst = arith.constant dense<0.000000e+00> : vector<8x128xf32>
    %3 = tpu.matmul %1, %2, %cst {dimension_numbers = #tpu.dot_dimension_numbers<[1], [0], [0], [1], [0, 0, 1, 1], [], []>} : vector<8x16xbf16>, vector<16x128xbf16>, vector<8x128xf32> -> vector<8x128xf32>
    %c0_3 = arith.constant 0 : index
    %c0_4 = arith.constant 0 : index
    %4 = vector.load %arg3[%c0_3, %c0_4] : memref<1x128xf32, #tpu.memory_space<vmem>>, vector<1x128xf32>
    %5 = vector.broadcast %4 : vector<1x128xf32> to vector<8x128xf32>
    %6 = arith.addf %3, %5 : vector<8x128xf32>
    %cst_5 = arith.constant 0.000000e+00 : f32
    %7 = vector.broadcast %cst_5 : f32 to vector<8x128xf32>
    %8 = arith.maximumf %6, %7 : vector<8x128xf32>
    %9 = arith.truncf %8 : vector<8x128xf32> to vector<8x128xbf16>
    %c0_6 = arith.constant 0 : index
    %c0_7 = arith.constant 0 : index
    %10 = vector.load %arg4[%c0_6, %c0_7] : memref<128x128xbf16, #tpu.memory_space<vmem>>, vector<128x128xbf16>
    %cst_8 = arith.constant dense<0.000000e+00> : vector<8x128xf32>
    %11 = tpu.matmul %9, %10, %cst_8 {dimension_numbers = #tpu.dot_dimension_numbers<[1], [0], [0], [1], [0, 0, 1, 1], [], []>} : vector<8x128xbf16>, vector<128x128xbf16>, vector<8x128xf32> -> vector<8x128xf32>
    %c0_9 = arith.constant 0 : index
    %c0_10 = arith.constant 0 : index
    %12 = vector.load %arg5[%c0_9, %c0_10] : memref<1x128xf32, #tpu.memory_space<vmem>>, vector<1x128xf32>
    %13 = vector.broadcast %12 : vector<1x128xf32> to vector<8x128xf32>
    %14 = arith.addf %11, %13 : vector<8x128xf32>
    %cst_11 = arith.constant 0.000000e+00 : f32
    %15 = vector.broadcast %cst_11 : f32 to vector<8x128xf32>
    %16 = arith.maximumf %14, %15 : vector<8x128xf32>
    %c0_12 = arith.constant 0 : index
    %c0_13 = arith.constant 0 : index
    %17 = vector.load %arg6[%c0_12, %c0_13] : memref<1x128xbf16, #tpu.memory_space<vmem>>, vector<1x128xbf16>
    %18 = arith.truncf %16 : vector<8x128xf32> to vector<8x128xbf16>
    %cst_14 = arith.constant dense<0.000000e+00> : vector<1x8xf32>
    %19 = tpu.matmul %17, %18, %cst_14 {dimension_numbers = #tpu.dot_dimension_numbers<[1], [1], [0], [0], [0, 0, 1, 0], [], []>} : vector<1x128xbf16>, vector<8x128xbf16>, vector<1x8xf32> -> vector<1x8xf32>
    %c0_15 = arith.constant 0 : index
    %c0_16 = arith.constant 0 : index
    %20 = vector.load %arg7[%c0_15, %c0_16] : memref<1x1xf32, #tpu.memory_space<vmem>>, vector<1x1xf32>
    %21 = vector.broadcast %20 : vector<1x1xf32> to vector<1x8xf32>
    %22 = arith.addf %19, %21 : vector<1x8xf32>
    %c0_17 = arith.constant 0 : index
    %c0_18 = arith.constant 0 : index
    %c0_19 = arith.constant 0 : index
    %23 = vector.load %arg8[%c0_17, %c0_18, %c0_19] : memref<1x1x8xf32, #tpu.memory_space<vmem>>, vector<1x1x8xf32>
    %24 = vector.shape_cast %23 : vector<1x1x8xf32> to vector<1x8xf32>
    %25 = vector.shape_cast %22 : vector<1x8xf32> to vector<1x1x8xf32>
    tpu.vector_store %arg8[%c0_17, %c0_18, %c0_19], %25 {strides = array<i32>} : memref<1x1x8xf32, #tpu.memory_space<vmem>>, vector<1x1x8xf32>,
    return
  }
  func.func @transform_0(%arg0: i32) -> (i32, i32) {
    %c0_i32 = arith.constant 0 : i32
    %c0_i32_0 = arith.constant 0 : i32
    return %arg0, %c0_i32 : i32, i32
  }
  func.func @transform_1(%arg0: i32) -> (i32, i32) {
    %c0_i32 = arith.constant 0 : i32
    %c0_i32_0 = arith.constant 0 : i32
    %c0_i32_1 = arith.constant 0 : i32
    return %c0_i32, %c0_i32_0 : i32, i32
  }
  func.func @transform_2(%arg0: i32) -> (i32, i32) {
    %c0_i32 = arith.constant 0 : i32
    %c0_i32_0 = arith.constant 0 : i32
    %c0_i32_1 = arith.constant 0 : i32
    return %c0_i32, %c0_i32_0 : i32, i32
  }
  func.func @transform_3(%arg0: i32) -> (i32, i32) {
    %c0_i32 = arith.constant 0 : i32
    %c0_i32_0 = arith.constant 0 : i32
    %c0_i32_1 = arith.constant 0 : i32
    return %c0_i32, %c0_i32_0 : i32, i32
  }
  func.func @transform_4(%arg0: i32) -> (i32, i32) {
    %c0_i32 = arith.constant 0 : i32
    %c0_i32_0 = arith.constant 0 : i32
    %c0_i32_1 = arith.constant 0 : i32
    return %c0_i32, %c0_i32_0 : i32, i32
  }
  func.func @transform_5(%arg0: i32) -> (i32, i32) {
    %c0_i32 = arith.constant 0 : i32
    %c0_i32_0 = arith.constant 0 : i32
    %c0_i32_1 = arith.constant 0 : i32
    return %c0_i32, %c0_i32_0 : i32, i32
  }
  func.func @transform_6(%arg0: i32) -> (i32, i32) {
    %c0_i32 = arith.constant 0 : i32
    %c0_i32_0 = arith.constant 0 : i32
    %c0_i32_1 = arith.constant 0 : i32
    return %c0_i32, %c0_i32_0 : i32, i32
  }
  func.func @transform_7(%arg0: i32) -> (i32, i32, i32) {
    %c0_i32 = arith.constant 0 : i32
    %c0_i32_0 = arith.constant 0 : i32
    %c0_i32_1 = arith.constant 0 : i32
    return %arg0, %c0_i32, %c0_i32_0 : i32, i32, i32
  }
}

</mosaic_0001>

<llo_original>
// kernel: tpu_custom_call.1
$region0: #{tpu_custom_call.1}
  #allocation0 [shape = 'u32[]', space=smem, size = 0x4, offset = 0x4, fixed_abs, tag = 'smem constant byte address 0x4 - core index']
  #allocation1 [shape = 'u32[144,128]{1,0:T(1,128)}', space=vmem, size = 0x12000, scoped, tag = 'internal scratch']
  #allocation2 [shape = 'f32[1,1]{1,0:T(1,128)S(1)}', space=vmem, size = 0x200, scoped, tag = 'scoped memory for tpu_custom_call.1']
  %s0 = inlined_call_operand.hbm [shape: f32[8,16], index: 0, kind: input, shape index: {}]
  %s1 = inlined_call_operand.hbm [shape: bf16[16,128], index: 1, kind: input, shape index: {}]
  %s2 = inlined_call_operand.vmem [shape: f32[1,128], index: 2, kind: input, shape index: {}]
  %s3 = inlined_call_operand.hbm [shape: bf16[128,128], index: 3, kind: input, shape index: {}]
  %s4 = inlined_call_operand.vmem [shape: f32[1,128], index: 4, kind: input, shape index: {}]
  %s5 = inlined_call_operand.vmem [shape: bf16[1,128], index: 5, kind: input, shape index: {}]
  %s6 = inlined_call_operand.<no memory space> [shape: f32[1,1], index: 6, kind: input, shape index: {}]
  %s7 = inlined_call_operand.hbm [shape: f32[1,1,8], index: 7, kind: output, shape index: {}]
  %s8 = sld [smem:[#allocation0]]
  $region50: #{tpu_custom_call.1} parent=0
    _
  %s10 = ssub.s32 1, %s8
  %s11 = scalar_select 0, %s10, %s8
  %v12 = vstv %s6
  %13 = vst [vmem:[#allocation2] sm:$0x1] %v12
  $region1: #{tpu_custom_call.1} parent=0
    #allocation3 [shape = 'u8[4096]{0}', space=vmem, size = 0x1000, scoped, tag = 'input window, operand 0, single buffered']
    #allocation4 [shape = 's32[1]{0}', space=sflag, size = 0x4, scoped, tag = 'scoped memory for tpu_custom_call.1']
    #allocation5 [shape = 's32[1]{0}', space=sflag, size = 0x4, scoped, tag = 'scoped memory for tpu_custom_call.1']
    #allocation6 [shape = 'u8[4096]{0}', space=vmem, size = 0x1000, scoped, tag = 'input window, operand 1, single buffered']
    #allocation7 [shape = 's32[1]{0}', space=sflag, size = 0x4, scoped, tag = 'scoped memory for tpu_custom_call.1']
    #allocation8 [shape = 'u8[32768]{0}', space=vmem, size = 0x8000, scoped, tag = 'input window, operand 3, single buffered']
    #allocation9 [shape = 'u8[512]{0}', space=vmem, size = 0x400, scoped, tag = 'output window, operand 0, single buffered']
    %14 = vsyncpa [#allocation4], 0
    %15 = vsyncpa [#allocation7], 0
    %16 = vsyncpa [#allocation5], 0
    // Predicated region
    $region2: #{tpu_custom_call.1} parent=1 // pred_check
      _
    $region3: #{tpu_custom_call.1} parent=1 // pred_check_branch
      %18 = sbr.rel (0) target = $region5
    $region4: #{tpu_custom_call.1} parent=1 // pred_region
      %s20 = ssub.s32 128, 128
      %21 = vsyncadd [#allocation4], %s20
      %s23 = sshll.u32 [#allocation3], 4
      %s24 = int_to_ptr.vmem [resolvable:$true] %s23
      %26 = dma.hbm_to_vmem [thread:$0]  %s0, 128, %s24, [#allocation4]
    $region5: #{tpu_custom_call.1} parent=1 // pred_fallthru
      _
    // Predicated region
    $region6: #{tpu_custom_call.1} parent=1 // pred_check
      _
    $region7: #{tpu_custom_call.1} parent=1 // pred_check_branch
      %28 = sbr.rel (0) target = $region9
    $region8: #{tpu_custom_call.1} parent=1 // pred_region
      %s30 = ssub.s32 128, 128
      %31 = vsyncadd [#allocation7], %s30
      %s32 = sshll.u32 [#allocation6], 4
      %s33 = int_to_ptr.vmem [resolvable:$true] %s32
      %38 = dma.hbm_to_vmem [thread:$0]  %s1, 128, %s33, [#allocation7], 64, 64, 4
    $region9: #{tpu_custom_call.1} parent=1 // pred_fallthru
      _
    // Predicated region
    $region10: #{tpu_custom_call.1} parent=1 // pred_check
      _
    $region11: #{tpu_custom_call.1} parent=1 // pred_check_branch
      %40 = sbr.rel (0) target = $region13
    $region12: #{tpu_custom_call.1} parent=1 // pred_region
      _
    $region13: #{tpu_custom_call.1} parent=1 // pred_fallthru
      _
    // Predicated region
    $region14: #{tpu_custom_call.1} parent=1 // pred_check
      _
    $region15: #{tpu_custom_call.1} parent=1 // pred_check_branch
      %42 = sbr.rel (0) target = $region17
    $region16: #{tpu_custom_call.1} parent=1 // pred_region
      %s44 = ssub.s32 1024, 1024
      %45 = vsyncadd [#allocation7], %s44
      %s46 = sshll.u32 [#allocation8], 4
      %s47 = int_to_ptr.vmem [resolvable:$true] %s46
      %52 = dma.hbm_to_vmem [thread:$0]  %s3, 1024, %s47, [#allocation7], 64, 64, 4
    $region17: #{tpu_custom_call.1} parent=1 // pred_fallthru
      _
    // Predicated region
    $region18: #{tpu_custom_call.1} parent=1 // pred_check
      _
    $region19: #{tpu_custom_call.1} parent=1 // pred_check_branch
      %54 = sbr.rel (0) target = $region21
    $region20: #{tpu_custom_call.1} parent=1 // pred_region
      _
    $region21: #{tpu_custom_call.1} parent=1 // pred_fallthru
      _
    // Predicated region
    $region22: #{tpu_custom_call.1} parent=1 // pred_check
      _
    $region23: #{tpu_custom_call.1} parent=1 // pred_check_branch
      %56 = sbr.rel (0) target = $region25
    $region24: #{tpu_custom_call.1} parent=1 // pred_region
      _
    $region25: #{tpu_custom_call.1} parent=1 // pred_fallthru
      _
    // Predicated region
    $region26: #{tpu_custom_call.1} parent=1 // pred_check
      _
    $region27: #{tpu_custom_call.1} parent=1 // pred_check_branch
      %58 = sbr.rel (0) target = $region29
    $region28: #{tpu_custom_call.1} parent=1 // pred_region
      _
    $region29: #{tpu_custom_call.1} parent=1 // pred_fallthru
      _
    // Predicated region
    $region30: #{tpu_custom_call.1} parent=1 // pred_check
      _
    $region31: #{tpu_custom_call.1} parent=1 // pred_check_branch
      %60 = sbr.rel (0) target = $region33
    $region32: #{tpu_custom_call.1} parent=1 // pred_region
      %61 = dma.done [#allocation4], 128
    $region33: #{tpu_custom_call.1} parent=1 // pred_fallthru
      _
    // Predicated region
    $region34: #{tpu_custom_call.1} parent=1 // pred_check
      _
    $region35: #{tpu_custom_call.1} parent=1 // pred_check_branch
      %63 = sbr.rel (0) target = $region37
    $region36: #{tpu_custom_call.1} parent=1 // pred_region
      %64 = dma.done [#allocation7], 128
    $region37: #{tpu_custom_call.1} parent=1 // pred_fallthru
      _
    // Predicated region
    $region38: #{tpu_custom_call.1} parent=1 // pred_check
      _
    $region39: #{tpu_custom_call.1} parent=1 // pred_check_branch
      %66 = sbr.rel (0) target = $region41
    $region40: #{tpu_custom_call.1} parent=1 // pred_region
      %67 = dma.done [#allocation7], 1024
    $region41: #{tpu_custom_call.1} parent=1 // pred_fallthru
      _
    %v69 = vld [vmem:[#allocation3] sm:$0xff]
    %v70 = vpack.c.bf16 %v69, %v69
    %v71 = vld [vmem:[#allocation6] sm:$0xf]
    %v72 = vld [vmem:[#allocation6 + $0x4] sm:$0xf]
    %v73 = vld [vmem:[%s2] sm:$0x1]
    %v75 = vlaneseq
    %v76 = vshrl.u32 %v75, 7
    %v77 = vsub.s32 0, %v76
    %v78 = vrot.slane %v73, %v77
    %v82 = vunpack.c.l.b16 %v71
    %v83 = vunpack.c.l.b16 %v72
    %v84 = vpack.c.b16 %v83, %v82
    %vm86 = vcmask 130048
    %v88 = vsel %vm86, %v70, 0
    %90 = vmatprep.subr.bf16.mxu0 0
    %91 = vmatpush1.bf16.msra.mxu0 0
    %92 = vmatprep.subr.bf16.mxu0 0
    %93 = vmatpush1.bf16.msra.mxu0 0
    %94 = vmatprep.subr.bf16.mxu0 0
    %95 = vmatpush1.bf16.msra.mxu0 0
    %96 = vmatprep.subr.bf16.mxu0 0
    %97 = vmatpush1.bf16.msra.mxu0 0
    %98 = vmatprep.subr.bf16.mxu0 0
    %99 = vmatpush1.bf16.msra.mxu0 0
    %100 = vmatprep.subr.bf16.mxu0 0
    %101 = vmatpush1.bf16.msra.mxu0 0
    %102 = vmatprep.subr.bf16.mxu0 0
    %103 = vmatpush1.bf16.msra.mxu0 0
    %104 = vmatprep.subr.bf16.mxu0 0
    %105 = vmatpush1.bf16.msra.mxu0 %v84
    %106 = vmatprep.subr.bf16.mxu0 0
    %107 = vmatpush2.bf16.msra.mxu0 0
    %108 = vmatprep.subr.bf16.mxu0 0
    %109 = vmatpush2.bf16.msra.mxu0 0
    %110 = vmatprep.subr.bf16.mxu0 0
    %111 = vmatpush2.bf16.msra.mxu0 0
    %112 = vmatprep.subr.bf16.mxu0 0
    %113 = vmatpush2.bf16.msra.mxu0 0
    %114 = vmatprep.subr.bf16.mxu0 0
    %115 = vmatpush2.bf16.msra.mxu0 0
    %116 = vmatprep.subr.bf16.mxu0 0
    %117 = vmatpush2.bf16.msra.mxu0 0
    %118 = vmatprep.subr.bf16.mxu0 0
    %119 = vmatpush2.bf16.msra.mxu0 0
    %120 = vmatprep.subr.bf16.mxu0 0
    %121 = vmatpush2.bf16.msra.mxu0 0
    %122 = vmatprep.mubr.bf16.mxu0 0
    %123 = vmatmul.mubr.bf16.gmra.mxu0 %v88
    %v124 = vpop.f32.mrf.mxu0
    %v125 = vadd.f32 %v78, %v124
    %v126 = vpop.f32.mrf.mxu0
    %v127 = vpop.f32.mrf.mxu0
    %v128 = vpop.f32.mrf.mxu0
    %129 = vdwg.mxu0
    %v130 = vmax.f32 %v125, 0.0
    %v131 = vpack.c.bf16 %v130, %v130
    %v132 = vld [vmem:[#allocation8] sm:$0xf]
    %v133 = vld [vmem:[#allocation8 + $0x4] sm:$0xf]
    %v134 = vld [vmem:[#allocation8 + $0x8] sm:$0xf]
    %v135 = vld [vmem:[#allocation8 + $0xc] sm:$0xf]
    %v136 = vld [vmem:[#allocation8 + $0x10] sm:$0xf]
    %v137 = vld [vmem:[#allocation8 + $0x14] sm:$0xf]
    %v138 = vld [vmem:[#allocation8 + $0x18] sm:$0xf]
    %v139 = vld [vmem:[#allocation8 + $0x1c] sm:$0xf]
    %v140 = vld [vmem:[#allocation8 + $0x20] sm:$0xf]
    %v141 = vld [vmem:[#allocation8 + $0x24] sm:$0xf]
    %v142 = vld [vmem:[#allocation8 + $0x28] sm:$0xf]
    %v143 = vld [vmem:[#allocation8 + $0x2c] sm:$0xf]
    %v144 = vld [vmem:[#allocation8 + $0x30] sm:$0xf]
    %v145 = vld [vmem:[#allocation8 + $0x34] sm:$0xf]
    %v146 = vld [vmem:[#allocation8 + $0x38] sm:$0xf]
    %v147 = vld [vmem:[#allocation8 + $0x3c] sm:$0xf]
    %v148 = vld [vmem:[%s4] sm:$0x1]
    %v150 = vlaneseq
    %v151 = vshrl.u32 %v150, 7
    %v152 = vsub.s32 0, %v151
    %v153 = vrot.slane %v148, %v152
    %v171 = vunpack.c.l.b16 %v132
    %v172 = vunpack.c.l.b16 %v133
    %v173 = vunpack.c.l.b16 %v134
    %v174 = vunpack.c.l.b16 %v135
    %v175 = vunpack.c.l.b16 %v136
    %v176 = vunpack.c.l.b16 %v137
    %v177 = vunpack.c.l.b16 %v138
    %v178 = vunpack.c.l.b16 %v139
    %v179 = vunpack.c.l.b16 %v140
    %v180 = vunpack.c.l.b16 %v141
    %v181 = vunpack.c.l.b16 %v142
    %v182 = vunpack.c.l.b16 %v143
    %v183 = vunpack.c.l.b16 %v144
    %v184 = vunpack.c.l.b16 %v145
    %v185 = vunpack.c.l.b16 %v146
    %v186 = vunpack.c.l.b16 %v147
    %v187 = vpack.c.b16 %v172, %v171
    %v188 = vpack.c.b16 %v174, %v173
    %v189 = vpack.c.b16 %v176, %v175
    %v190 = vpack.c.b16 %v178, %v177
    %v191 = vpack.c.b16 %v180, %v179
    %v192 = vpack.c.b16 %v182, %v181
    %v193 = vpack.c.b16 %v184, %v183
    %v194 = vpack.c.b16 %v186, %v185
    %203 = vmatprep.subr.bf16.mxu0 0
    %204 = vmatpush1.bf16.msra.mxu0 %v194
    %205 = vmatprep.subr.bf16.mxu0 0
    %206 = vmatpush1.bf16.msra.mxu0 %v193
    %207 = vmatprep.subr.bf16.mxu0 0
    %208 = vmatpush1.bf16.msra.mxu0 %v192
    %209 = vmatprep.subr.bf16.mxu0 0
    %210 = vmatpush1.bf16.msra.mxu0 %v191
    %211 = vmatprep.subr.bf16.mxu0 0
    %212 = vmatpush1.bf16.msra.mxu0 %v190
    %213 = vmatprep.subr.bf16.mxu0 0
    %214 = vmatpush1.bf16.msra.mxu0 %v189
    %215 = vmatprep.subr.bf16.mxu0 0
    %216 = vmatpush1.bf16.msra.mxu0 %v188
    %217 = vmatprep.subr.bf16.mxu0 0
    %218 = vmatpush1.bf16.msra.mxu0 %v187
    %219 = vmatprep.subr.bf16.mxu0 0
    %220 = vmatpush2.bf16.msra.mxu0 0
    %221 = vmatprep.subr.bf16.mxu0 0
    %222 = vmatpush2.bf16.msra.mxu0 0
    %223 = vmatprep.subr.bf16.mxu0 0
    %224 = vmatpush2.bf16.msra.mxu0 0
    %225 = vmatprep.subr.bf16.mxu0 0
    %226 = vmatpush2.bf16.msra.mxu0 0
    %227 = vmatprep.subr.bf16.mxu0 0
    %228 = vmatpush2.bf16.msra.mxu0 0
    %229 = vmatprep.subr.bf16.mxu0 0
    %230 = vmatpush2.bf16.msra.mxu0 0
    %231 = vmatprep.subr.bf16.mxu0 0
    %232 = vmatpush2.bf16.msra.mxu0 0
    %233 = vmatprep.subr.bf16.mxu0 0
    %234 = vmatpush2.bf16.msra.mxu0 0
    %235 = vmatprep.mubr.bf16.mxu0 0
    %236 = vmatmul.mubr.bf16.gmra.mxu0 %v131
    %v237 = vpop.f32.mrf.mxu0
    %v238 = vadd.f32 %v153, %v237
    %v239 = vpop.f32.mrf.mxu0
    %v240 = vpop.f32.mrf.mxu0
    %v241 = vpop.f32.mrf.mxu0
    %242 = vdwg.mxu0
    %v243 = vmax.f32 %v238, 0.0
    %v244 = vld [vmem:[%s5] sm:$0x1]
    %v245 = vpack.c.bf16 %v243, %v243
    %v246 = vld [vmem:[#allocation2] sm:$0x1]
    %248 = vset.pattern.permute.xlu0 0
    %249 = vperm.xlu0 %248, %v246
    %v250 = vpop.permute.xlu0 %249
    %v252 = vlaneseq
    %v253 = vshrl.u32 %v252, 7
    %v254 = vsub.s32 0, %v253
    %v255 = vrot.slane %v250, %v254
    %256 = vmatprep.subr.bf16.mxu0 0
    %257 = vmatpush1.bf16.xpose.msra.mxu0 0
    %258 = vmatprep.subr.bf16.mxu0 0
    %259 = vmatpush1.bf16.xpose.msra.mxu0 0
    %260 = vmatprep.subr.bf16.mxu0 0
    %261 = vmatpush1.bf16.xpose.msra.mxu0 0
    %262 = vmatprep.subr.bf16.mxu0 0
    %263 = vmatpush1.bf16.xpose.msra.mxu0 0
    %264 = vmatprep.subr.bf16.mxu0 0
    %265 = vmatpush1.bf16.xpose.msra.mxu0 0
    %266 = vmatprep.subr.bf16.mxu0 0
    %267 = vmatpush1.bf16.xpose.msra.mxu0 0
    %268 = vmatprep.subr.bf16.mxu0 0
    %269 = vmatpush1.bf16.xpose.msra.mxu0 0
    %270 = vmatprep.subr.bf16.mxu0 0
    %271 = vmatpush1.bf16.xpose.msra.mxu0 %v245
    %272 = vmatprep.subr.bf16.mxu0 0
    %273 = vmatpush2.bf16.xpose.msra.mxu0 0
    %274 = vmatprep.subr.bf16.mxu0 0
    %275 = vmatpush2.bf16.xpose.msra.mxu0 0
    %276 = vmatprep.subr.bf16.mxu0 0
    %277 = vmatpush2.bf16.xpose.msra.mxu0 0
    %278 = vmatprep.subr.bf16.mxu0 0
    %279 = vmatpush2.bf16.xpose.msra.mxu0 0
    %280 = vmatprep.subr.bf16.mxu0 0
    %281 = vmatpush2.bf16.xpose.msra.mxu0 0
    %282 = vmatprep.subr.bf16.mxu0 0
    %283 = vmatpush2.bf16.xpose.msra.mxu0 0
    %284 = vmatprep.subr.bf16.mxu0 0
    %285 = vmatpush2.bf16.xpose.msra.mxu0 0
    %286 = vmatprep.subr.bf16.mxu0 0
    %287 = vmatpush2.bf16.xpose.msra.mxu0 0
    %288 = vmatprep.mubr.bf16.mxu0 0
    %289 = vmatmul.mubr.bf16.gmra.mxu0 %v244
    %v290 = vpop.f32.mrf.mxu0
    %v291 = vadd.f32 %v255, %v290
    %v292 = vpop.f32.mrf.mxu0
    %v293 = vpop.f32.mrf.mxu0
    %v294 = vpop.f32.mrf.mxu0
    %295 = vdwg.mxu0
    %vm296 = vcmask 57344
    %297 = vst.msk [vmem:[#allocation9] sm:$0x1] %vm296, %v291
    // Predicated region
    $region42: #{tpu_custom_call.1} parent=1 // pred_check
      _
    $region43: #{tpu_custom_call.1} parent=1 // pred_check_branch
      %299 = sbr.rel (0) target = $region45
    $region44: #{tpu_custom_call.1} parent=1 // pred_region
      %s301 = ssub.s32 16, 16
      %302 = vsyncadd [#allocation5], %s301
      %s304 = sshll.u32 [#allocation9], 4
      %s305 = int_to_ptr.vmem [resolvable:$true] %s304
      %307 = dma.vmem_to_hbm [thread:$0]  %s305, 16, %s7, [#allocation5]
    $region45: #{tpu_custom_call.1} parent=1 // pred_fallthru
      _
    // Predicated region
    $region46: #{tpu_custom_call.1} parent=1 // pred_check
      _
    $region47: #{tpu_custom_call.1} parent=1 // pred_check_branch
      %309 = sbr.rel (0) target = $region49
    $region48: #{tpu_custom_call.1} parent=1 // pred_region
      %310 = dma.done [#allocation5], 16
    $region49: #{tpu_custom_call.1} parent=1 // pred_fallthru
      _
    %311 = vsyncpa [#allocation4], 1
    %312 = vsyncpa [#allocation7], 1
    %313 = vsyncpa [#allocation5], 1

</llo_original>
